<compile_context>
chip_gen: v7x
topology: tpu7x:2x2x1
jax: 0.10.0
libtpu: 0.0.40
codegen_flags: <defaults>
</compile_context>

<pallas_src>
import functools

import jax
import jax.numpy as jnp
from jax.experimental import pallas as pl
from jax.experimental.pallas import tpu as pltpu


def _input_embedding_kernel(x_ref, w_ref, b_ref, g_ref, beta_ref, o_ref, *, eps):
    """One grid step handles a (Mt, IN_DIM) row tile; M = B*S rows total."""
    x = x_ref[...]                                   # (Mt, IN_DIM)

    # Fused Linear: single MXU matmul + bias add (lane-dense, OUT_DIM lanes).
    y = jnp.dot(x, w_ref[...], preferred_element_type=jnp.float32) + b_ref[...]

    # LayerNorm over the feature (last) axis, matching nn.LayerNorm (biased variance).
    mean = jnp.mean(y, axis=-1, keepdims=True)
    yc = y - mean
    var = jnp.mean(yc * yc, axis=-1, keepdims=True)
    inv = jax.lax.rsqrt(var + eps)                   # EUP rsqrt -- free slot
    normed = yc * inv

    # Affine + single lane-dense store per grid step.
    o_ref[...] = (normed * g_ref[...] + beta_ref[...]).astype(o_ref.dtype)


def input_embedding_pallas(x, w, b, gamma, beta, *, eps=1e-5):
    """x: (B, S, IN_DIM) f32.  w: (IN_DIM, OUT_DIM) (pre-transposed nn.Linear weight),
       b/gamma/beta: (OUT_DIM,).  Returns (B, S, OUT_DIM) f32 (eval-mode forward)."""
    B, S, IN_DIM = x.shape
    OUT_DIM = w.shape[1]
    M = B * S

    # Fold batch & seq into one M row axis -> one big matmul instead of B tiny ones.
    x2 = x.reshape(M, IN_DIM)
    b2 = b.reshape(1, OUT_DIM)
    g2 = gamma.reshape(1, OUT_DIM)
    beta2 = beta.reshape(1, OUT_DIM)

    # Row-tile size: whole problem in one step when small; 512-row tiles otherwise.
    Mt = M if M <= 512 else 512
    grid = (pl.cdiv(M, Mt),)

    kernel = functools.partial(_input_embedding_kernel, eps=eps)

    grid_spec = pltpu.PrefetchScalarGridSpec(
        num_scalar_prefetch=0,
        grid=grid,
        in_specs=[
            pl.BlockSpec((Mt, IN_DIM), lambda i: (i, 0)),        # x rows
            pl.BlockSpec((IN_DIM, OUT_DIM), lambda i: (0, 0)),   # W
            pl.BlockSpec((1, OUT_DIM), lambda i: (0, 0)),        # bias
            pl.BlockSpec((1, OUT_DIM), lambda i: (0, 0)),        # gamma
            pl.BlockSpec((1, OUT_DIM), lambda i: (0, 0)),        # beta
        ],
        out_specs=pl.BlockSpec((Mt, OUT_DIM), lambda i: (i, 0)),
    )

    out2 = pl.pallas_call(
        kernel,
        out_shape=jax.ShapeDtypeStruct((M, OUT_DIM), jnp.float32),
        grid_spec=grid_spec,
        compiler_params=pltpu.CompilerParams(
            dimension_semantics=("parallel",)),
    )(x2, w, b2, g2, beta2)

    return out2.reshape(B, S, OUT_DIM)


def input_embedding_ref(x, w, b, gamma, beta, *, eps=1e-5):
    """Plain-JAX reference mirroring the PyTorch forward (eval mode: dropout = identity)."""
    y = x @ w + b
    mean = jnp.mean(y, axis=-1, keepdims=True)
    var = jnp.mean((y - mean) ** 2, axis=-1, keepdims=True)
    normed = (y - mean) / jnp.sqrt(var + eps)
    return normed * gamma + beta


if __name__ == "__main__":
    B, S = 2, 8
    IN_DIM, OUT_DIM = 16, 32

    key = jax.random.PRNGKey(0)
    kx, kw, kb, kg, kbe = jax.random.split(key, 5)

    x = jax.random.normal(kx, (B, S, IN_DIM), dtype=jnp.float32)

    # Deterministic "Linear" parameters, stored pre-transposed as (IN_DIM, OUT_DIM).
    scale = 1.0 / (IN_DIM ** 0.5)
    w = jax.random.uniform(kw, (IN_DIM, OUT_DIM), jnp.float32, -scale, scale)
    b = jax.random.uniform(kb, (OUT_DIM,), jnp.float32, -scale, scale)
    # LayerNorm affine params (non-trivial values to exercise the affine path).
    gamma = 1.0 + 0.1 * jax.random.normal(kg, (OUT_DIM,), dtype=jnp.float32)
    beta = 0.1 * jax.random.normal(kbe, (OUT_DIM,), dtype=jnp.float32)

    out = input_embedding_pallas(x, w, b, gamma, beta)
    out = jax.block_until_ready(out)

    ref = input_embedding_ref(x, w, b, gamma, beta)
    assert out.shape == (B, S, OUT_DIM)
    assert jnp.allclose(out, ref, atol=1e-4, rtol=1e-4), "mismatch vs reference"

    print("KERNEL_OK")
</pallas_src>

<mosaic_0001>
module attributes {stable_mosaic.version = 11 : i64} {
  func.func @_input_embedding_kernel(%arg0: i32, %arg1: memref<16x16xf32, #tpu.memory_space<vmem>>, %arg2: memref<16x32xf32, #tpu.memory_space<vmem>>, %arg3: memref<1x32xf32, #tpu.memory_space<vmem>>, %arg4: memref<1x32xf32, #tpu.memory_space<vmem>>, %arg5: memref<1x32xf32, #tpu.memory_space<vmem>>, %arg6: memref<16x32xf32, #tpu.memory_space<vmem>>) attributes {dimension_semantics = [#tpu.dimension_semantics<parallel>], iteration_bounds = array<i64: 1>, scalar_prefetch = 0 : i64, scratch_operands = 0 : i64, tpu.core_type = #tpu.core_type<tc>, window_params = [{transform_indices = @transform_0, window_bounds = array<i64: 16, 16>}, {pipeline_mode = #tpu.pipeline_mode<synchronous>, transform_indices = @transform_1, window_bounds = array<i64: 16, 32>}, {pipeline_mode = #tpu.pipeline_mode<synchronous>, transform_indices = @transform_2, window_bounds = array<i64: 1, 32>}, {pipeline_mode = #tpu.pipeline_mode<synchronous>, transform_indices = @transform_3, window_bounds = array<i64: 1, 32>}, {pipeline_mode = #tpu.pipeline_mode<synchronous>, transform_indices = @transform_4, window_bounds = array<i64: 1, 32>}, {transform_indices = @transform_5, window_bounds = array<i64: 16, 32>}]} {
    %c0 = arith.constant 0 : index
    %c0_0 = arith.constant 0 : index
    %0 = vector.load %arg1[%c0, %c0_0] : memref<16x16xf32, #tpu.memory_space<vmem>>, vector<16x16xf32>
    %c0_1 = arith.constant 0 : index
    %c0_2 = arith.constant 0 : index
    %1 = vector.load %arg2[%c0_1, %c0_2] : memref<16x32xf32, #tpu.memory_space<vmem>>, vector<16x32xf32>
    %cst = arith.constant dense<0.000000e+00> : vector<16x32xf32>
    %2 = tpu.matmul %0, %1, %cst {dimension_numbers = #tpu.dot_dimension_numbers<[1], [0], [0], [1], [0, 0, 1, 1], [], []>} : vector<16x16xf32>, vector<16x32xf32>, vector<16x32xf32> -> vector<16x32xf32>
    %c0_3 = arith.constant 0 : index
    %c0_4 = arith.constant 0 : index
    %3 = vector.load %arg3[%c0_3, %c0_4] : memref<1x32xf32, #tpu.memory_space<vmem>>, vector<1x32xf32>
    %4 = vector.broadcast %3 : vector<1x32xf32> to vector<16x32xf32>
    %5 = arith.addf %2, %4 : vector<16x32xf32>
    %cst_5 = arith.constant dense<0.000000e+00> : vector<16xf32>
    %6 = vector.multi_reduction <add>, %5, %cst_5 [1] : vector<16x32xf32> to vector<16xf32>
    %7 = vector.shape_cast %6 : vector<16xf32> to vector<16x1xf32>
    %cst_6 = arith.constant 3.200000e+01 : f32
    %8 = vector.broadcast %cst_6 : f32 to vector<16x1xf32>
    %9 = arith.divf %7, %8 : vector<16x1xf32>
    %10 = vector.broadcast %9 : vector<16x1xf32> to vector<16x32xf32>
    %11 = arith.subf %5, %10 : vector<16x32xf32>
    %12 = arith.mulf %11, %11 : vector<16x32xf32>
    %cst_7 = arith.constant dense<0.000000e+00> : vector<16xf32>
    %13 = vector.multi_reduction <add>, %12, %cst_7 [1] : vector<16x32xf32> to vector<16xf32>
    %14 = vector.shape_cast %13 : vector<16xf32> to vector<16x1xf32>
    %cst_8 = arith.constant 3.200000e+01 : f32
    %15 = vector.broadcast %cst_8 : f32 to vector<16x1xf32>
    %16 = arith.divf %14, %15 : vector<16x1xf32>
    %cst_9 = arith.constant 9.99999974E-6 : f32
    %17 = vector.broadcast %cst_9 : f32 to vector<16x1xf32>
    %18 = arith.addf %16, %17 : vector<16x1xf32>
    %19 = math.rsqrt %18 : vector<16x1xf32>
    %20 = vector.broadcast %19 : vector<16x1xf32> to vector<16x32xf32>
    %21 = arith.mulf %11, %20 : vector<16x32xf32>
    %c0_10 = arith.constant 0 : index
    %c0_11 = arith.constant 0 : index
    %22 = vector.load %arg4[%c0_10, %c0_11] : memref<1x32xf32, #tpu.memory_space<vmem>>, vector<1x32xf32>
    %23 = vector.broadcast %22 : vector<1x32xf32> to vector<16x32xf32>
    %24 = arith.mulf %21, %23 : vector<16x32xf32>
    %c0_12 = arith.constant 0 : index
    %c0_13 = arith.constant 0 : index
    %25 = vector.load %arg5[%c0_12, %c0_13] : memref<1x32xf32, #tpu.memory_space<vmem>>, vector<1x32xf32>
    %26 = vector.broadcast %25 : vector<1x32xf32> to vector<16x32xf32>
    %27 = arith.addf %24, %26 : vector<16x32xf32>
    %c0_14 = arith.constant 0 : index
    %c0_15 = arith.constant 0 : index
    %28 = vector.load %arg6[%c0_14, %c0_15] : memref<16x32xf32, #tpu.memory_space<vmem>>, vector<16x32xf32>
    tpu.vector_store %arg6[%c0_14, %c0_15], %27 {strides = array<i32>} : memref<16x32xf32, #tpu.memory_space<vmem>>, vector<16x32xf32>,
    return
  }
  func.func @transform_0(%arg0: i32) -> (i32, i32) {
    %c0_i32 = arith.constant 0 : i32
    %c0_i32_0 = arith.constant 0 : i32
    return %arg0, %c0_i32 : i32, i32
  }
  func.func @transform_1(%arg0: i32) -> (i32, i32) {
    %c0_i32 = arith.constant 0 : i32
    %c0_i32_0 = arith.constant 0 : i32
    %c0_i32_1 = arith.constant 0 : i32
    return %c0_i32, %c0_i32_0 : i32, i32
  }
  func.func @transform_2(%arg0: i32) -> (i32, i32) {
    %c0_i32 = arith.constant 0 : i32
    %c0_i32_0 = arith.constant 0 : i32
    %c0_i32_1 = arith.constant 0 : i32
    return %c0_i32, %c0_i32_0 : i32, i32
  }
  func.func @transform_3(%arg0: i32) -> (i32, i32) {
    %c0_i32 = arith.constant 0 : i32
    %c0_i32_0 = arith.constant 0 : i32
    %c0_i32_1 = arith.constant 0 : i32
    return %c0_i32, %c0_i32_0 : i32, i32
  }
  func.func @transform_4(%arg0: i32) -> (i32, i32) {
    %c0_i32 = arith.constant 0 : i32
    %c0_i32_0 = arith.constant 0 : i32
    %c0_i32_1 = arith.constant 0 : i32
    return %c0_i32, %c0_i32_0 : i32, i32
  }
  func.func @transform_5(%arg0: i32) -> (i32, i32) {
    %c0_i32 = arith.constant 0 : i32
    %c0_i32_0 = arith.constant 0 : i32
    return %arg0, %c0_i32 : i32, i32
  }
}

</mosaic_0001>

<llo_original>
// kernel: tpu_custom_call.1
$region0: #{tpu_custom_call.1}
  #allocation0 [shape = 'u32[]', space=smem, size = 0x4, offset = 0x4, fixed_abs, tag = 'smem constant byte address 0x4 - core index']
  #allocation1 [shape = 'u32[144,128]{1,0:T(1,128)}', space=vmem, size = 0x12000, scoped, tag = 'internal scratch']
  %s0 = inlined_call_operand.hbm [shape: f32[16,16], index: 0, kind: input, shape index: {}]
  %s1 = inlined_call_operand.hbm [shape: f32[16,32], index: 1, kind: input, shape index: {}]
  %s2 = inlined_call_operand.vmem [shape: f32[1,32], index: 2, kind: input, shape index: {}]
  %s3 = inlined_call_operand.vmem [shape: f32[1,32], index: 3, kind: input, shape index: {}]
  %s4 = inlined_call_operand.vmem [shape: f32[1,32], index: 4, kind: input, shape index: {}]
  %s5 = inlined_call_operand.hbm [shape: f32[16,32], index: 5, kind: output, shape index: {}]
  %s6 = sld [smem:[#allocation0]]
  $region38: #{tpu_custom_call.1} parent=0
    _
  %s8 = ssub.s32 1, %s6
  %s9 = scalar_select 0, %s8, %s6
  $region1: #{tpu_custom_call.1} parent=0
    #allocation2 [shape = 'u8[8192]{0}', space=vmem, size = 0x2000, scoped, tag = 'input window, operand 0, single buffered']
    #allocation3 [shape = 's32[1]{0}', space=sflag, size = 0x4, scoped, tag = 'scoped memory for tpu_custom_call.1']
    #allocation4 [shape = 's32[1]{0}', space=sflag, size = 0x4, scoped, tag = 'scoped memory for tpu_custom_call.1']
    #allocation5 [shape = 'u8[8192]{0}', space=vmem, size = 0x2000, scoped, tag = 'input window, operand 1, single buffered']
    #allocation6 [shape = 's32[1]{0}', space=sflag, size = 0x4, scoped, tag = 'scoped memory for tpu_custom_call.1']
    #allocation7 [shape = 'u8[8192]{0}', space=vmem, size = 0x2000, scoped, tag = 'output window, operand 0, single buffered']
    %10 = vsyncpa [#allocation3], 0
    %11 = vsyncpa [#allocation6], 0
    %12 = vsyncpa [#allocation4], 0
    // Predicated region
    $region2: #{tpu_custom_call.1} parent=1 // pred_check
      _
    $region3: #{tpu_custom_call.1} parent=1 // pred_check_branch
      %14 = sbr.rel (0) target = $region5
    $region4: #{tpu_custom_call.1} parent=1 // pred_region
      %s16 = ssub.s32 256, 256
      %17 = vsyncadd [#allocation3], %s16
      %s18 = sshll.u32 [#allocation2], 4
      %s19 = int_to_ptr.vmem [resolvable:$true] %s18
      %24 = dma.hbm_to_vmem [thread:$0]  %s0, 256, %s19, [#allocation3], 128, 128, 8
    $region5: #{tpu_custom_call.1} parent=1 // pred_fallthru
      _
    // Predicated region
    $region6: #{tpu_custom_call.1} parent=1 // pred_check
      _
    $region7: #{tpu_custom_call.1} parent=1 // pred_check_branch
      %26 = sbr.rel (0) target = $region9
    $region8: #{tpu_custom_call.1} parent=1 // pred_region
      %s28 = ssub.s32 256, 256
      %29 = vsyncadd [#allocation6], %s28
      %s30 = sshll.u32 [#allocation5], 4
      %s31 = int_to_ptr.vmem [resolvable:$true] %s30
      %36 = dma.hbm_to_vmem [thread:$0]  %s1, 256, %s31, [#allocation6], 128, 128, 8
    $region9: #{tpu_custom_call.1} parent=1 // pred_fallthru
      _
    // Predicated region
    $region10: #{tpu_custom_call.1} parent=1 // pred_check
      _
    $region11: #{tpu_custom_call.1} parent=1 // pred_check_branch
      %38 = sbr.rel (0) target = $region13
    $region12: #{tpu_custom_call.1} parent=1 // pred_region
      _
    $region13: #{tpu_custom_call.1} parent=1 // pred_fallthru
      _
    // Predicated region
    $region14: #{tpu_custom_call.1} parent=1 // pred_check
      _
    $region15: #{tpu_custom_call.1} parent=1 // pred_check_branch
      %40 = sbr.rel (0) target = $region17
    $region16: #{tpu_custom_call.1} parent=1 // pred_region
      _
    $region17: #{tpu_custom_call.1} parent=1 // pred_fallthru
      _
    // Predicated region
    $region18: #{tpu_custom_call.1} parent=1 // pred_check
      _
    $region19: #{tpu_custom_call.1} parent=1 // pred_check_branch
      %42 = sbr.rel (0) target = $region21
    $region20: #{tpu_custom_call.1} parent=1 // pred_region
      _
    $region21: #{tpu_custom_call.1} parent=1 // pred_fallthru
      _
    // Predicated region
    $region22: #{tpu_custom_call.1} parent=1 // pred_check
      _
    $region23: #{tpu_custom_call.1} parent=1 // pred_check_branch
      %44 = sbr.rel (0) target = $region25
    $region24: #{tpu_custom_call.1} parent=1 // pred_region
      %45 = dma.done [#allocation3], 256
    $region25: #{tpu_custom_call.1} parent=1 // pred_fallthru
      _
    // Predicated region
    $region26: #{tpu_custom_call.1} parent=1 // pred_check
      _
    $region27: #{tpu_custom_call.1} parent=1 // pred_check_branch
      %47 = sbr.rel (0) target = $region29
    $region28: #{tpu_custom_call.1} parent=1 // pred_region
      %48 = dma.done [#allocation6], 256
    $region29: #{tpu_custom_call.1} parent=1 // pred_fallthru
      _
    %v49 = vld [vmem:[#allocation2] sm:$0xff]
    %v50 = vld [vmem:[#allocation2 + $0x8] sm:$0xff]
    %v51 = vld [vmem:[#allocation5] sm:$0xff]
    %v52 = vld [vmem:[#allocation5 + $0x8] sm:$0xff]
    %v53 = vld [vmem:[%s2] sm:$0x1]
    %v55 = vlaneseq
    %v56 = vshrl.u32 %v55, 7
    %v57 = vsub.s32 0, %v56
    %v58 = vrot.slane %v53, %v57
    %vm60 = vcmask 130048
    %v62 = vsel %vm60, %v49, 0
    %v65 = vsel %vm60, %v50, 0
    %67 = vmatprep.subr.mxu0 0.0
    %68 = vmatpush1.msra.mxu0 %v51
    %69 = vmatprep.subr.mxu0 0.0
    %70 = vmatpush1.msra.mxu0 %v52
    %71 = vmatprep.subr.mxu0 0.0
    %72 = vmatpush1.msra.mxu0 0.0
    %73 = vmatprep.subr.mxu0 0.0
    %74 = vmatpush1.msra.mxu0 0.0
    %75 = vmatprep.subr.mxu0 0.0
    %76 = vmatpush1.msra.mxu0 0.0
    %77 = vmatprep.subr.mxu0 0.0
    %78 = vmatpush1.msra.mxu0 0.0
    %79 = vmatprep.subr.mxu0 0.0
    %80 = vmatpush1.msra.mxu0 0.0
    %81 = vmatprep.subr.mxu0 0.0
    %82 = vmatpush1.msra.mxu0 0.0
    %83 = vmatprep.subr.mxu0 0.0
    %84 = vmatpush1.msra.mxu0 0.0
    %85 = vmatprep.subr.mxu0 0.0
    %86 = vmatpush1.msra.mxu0 0.0
    %87 = vmatprep.subr.mxu0 0.0
    %88 = vmatpush1.msra.mxu0 0.0
    %89 = vmatprep.subr.mxu0 0.0
    %90 = vmatpush1.msra.mxu0 0.0
    %91 = vmatprep.subr.mxu0 0.0
    %92 = vmatpush1.msra.mxu0 0.0
    %93 = vmatprep.subr.mxu0 0.0
    %94 = vmatpush1.msra.mxu0 0.0
    %95 = vmatprep.subr.mxu0 0.0
    %96 = vmatpush1.msra.mxu0 0.0
    %97 = vmatprep.subr.mxu0 0.0
    %98 = vmatpush1.msra.mxu0 0.0
    %99 = vmatprep.subr.mxu0 0.0
    %100 = vmatpush1.msra.mxu0 0.0
    %101 = vmatprep.subr.mxu0 0.0
    %102 = vmatpush1.msra.mxu0 0.0
    %103 = vmatprep.subr.mxu0 0.0
    %104 = vmatpush1.msra.mxu0 0.0
    %105 = vmatprep.subr.mxu0 0.0
    %106 = vmatpush1.msra.mxu0 0.0
    %107 = vmatprep.subr.mxu0 0.0
    %108 = vmatpush1.msra.mxu0 0.0
    %109 = vmatprep.subr.mxu0 0.0
    %110 = vmatpush1.msra.mxu0 0.0
    %111 = vmatprep.subr.mxu0 0.0
    %112 = vmatpush1.msra.mxu0 0.0
    %113 = vmatprep.subr.mxu0 0.0
    %114 = vmatpush1.msra.mxu0 0.0
    %115 = vmatprep.subr.mxu0 0.0
    %116 = vmatpush1.msra.mxu0 0.0
    %117 = vmatprep.subr.mxu0 0.0
    %118 = vmatpush1.msra.mxu0 0.0
    %119 = vmatprep.subr.mxu0 0.0
    %120 = vmatpush1.msra.mxu0 0.0
    %121 = vmatprep.subr.mxu0 0.0
    %122 = vmatpush1.msra.mxu0 0.0
    %123 = vmatprep.subr.mxu0 0.0
    %124 = vmatpush1.msra.mxu0 0.0
    %125 = vmatprep.subr.mxu0 0.0
    %126 = vmatpush1.msra.mxu0 0.0
    %127 = vmatprep.subr.mxu0 0.0
    %128 = vmatpush1.msra.mxu0 0.0
    %129 = vmatprep.subr.mxu0 0.0
    %130 = vmatpush1.msra.mxu0 0.0
    %131 = vmatprep.mubr.f32.mxu0 0.0
    %132 = vmatmul.mubr.f32.gmra.mrb[0].mxu0 %v62
    %v133 = vpop.f32.mrb[0].mxu0
    %v134 = vadd.f32 %v58, %v133
    %v135 = vpop.f32.mrb[0].mxu0
    %136 = vmatprep.mubr.f32.mxu0 0.0
    %137 = vmatmul.mubr.f32.gmra.mrb[0].mxu0 %v65
    %v138 = vpop.f32.mrb[0].mxu0
    %v139 = vadd.f32 %v58, %v138
    %v140 = vpop.f32.mrb[0].mxu0
    %141 = vdwg.mxu0
    %vm142 = vcmask 261120
    %v143 = vsel %vm142, %v134, 0.0
    %144 = vadd.xlane.f32.xlu0 %v143
    %v145 = vpop.xlane.xlu0 %144
    %v146 = vsel %vm142, %v139, 0.0
    %147 = vadd.xlane.f32.xlu0 %v146
    %v148 = vpop.xlane.xlu0 %147
    %v149 = vrcp.pop 32.0
    %v150 = vmul.f32 %v145, %v149
    %v151 = vmul.f32 %v148, %v149
    %v152 = vsub.f32 %v134, %v150
    %v153 = vsub.f32 %v139, %v151
    %v154 = vmul.f32 %v152, %v152
    %v155 = vmul.f32 %v153, %v153
    %v156 = vsel %vm142, %v154, 0.0
    %157 = vadd.xlane.f32.xlu0 %v156
    %v158 = vpop.xlane.xlu0 %157
    %v159 = vsel %vm142, %v155, 0.0
    %160 = vadd.xlane.f32.xlu0 %v159
    %v161 = vpop.xlane.xlu0 %160
    %v162 = vmul.f32 %v158, %v149
    %v163 = vmul.f32 %v161, %v149
    %v164 = vadd.f32 %v162, 1e-05
    %v165 = vadd.f32 %v163, 1e-05
    %v166 = vrsqrt.pop %v164
    %v167 = vrsqrt.pop %v165
    %v168 = vmul.f32 %v152, %v166
    %v169 = vmul.f32 %v153, %v167
    %v170 = vld [vmem:[%s3] sm:$0x1]
    %v172 = vlaneseq
    %v173 = vshrl.u32 %v172, 7
    %v174 = vsub.s32 0, %v173
    %v175 = vrot.slane %v170, %v174
    %v177 = vmul.f32 %v168, %v175
    %v178 = vmul.f32 %v169, %v175
    %v179 = vld [vmem:[%s4] sm:$0x1]
    %v181 = vlaneseq
    %v182 = vshrl.u32 %v181, 7
    %v183 = vsub.s32 0, %v182
    %v184 = vrot.slane %v179, %v183
    %v186 = vadd.f32 %v177, %v184
    %v187 = vadd.f32 %v178, %v184
    %188 = vst.msk [vmem:[#allocation7] sm:$0xff] %vm142, %v186
    %189 = vst.msk [vmem:[#allocation7 + $0x8] sm:$0xff] %vm142, %v187
    // Predicated region
    $region30: #{tpu_custom_call.1} parent=1 // pred_check
      _
    $region31: #{tpu_custom_call.1} parent=1 // pred_check_branch
      %191 = sbr.rel (0) target = $region33
    $region32: #{tpu_custom_call.1} parent=1 // pred_region
      %s193 = ssub.s32 256, 256
      %194 = vsyncadd [#allocation4], %s193
      %s195 = sshll.u32 [#allocation7], 4
      %s196 = int_to_ptr.vmem [resolvable:$true] %s195
      %201 = dma.vmem_to_hbm [thread:$0]  %s196, 256, %s5, [#allocation4], 128, 128, 8
    $region33: #{tpu_custom_call.1} parent=1 // pred_fallthru
      _
    // Predicated region
    $region34: #{tpu_custom_call.1} parent=1 // pred_check
      _
    $region35: #{tpu_custom_call.1} parent=1 // pred_check_branch
      %203 = sbr.rel (0) target = $region37
    $region36: #{tpu_custom_call.1} parent=1 // pred_region
      %204 = dma.done [#allocation4], 256
    $region37: #{tpu_custom_call.1} parent=1 // pred_fallthru
      _
    %205 = vsyncpa [#allocation3], 1
    %206 = vsyncpa [#allocation6], 1
    %207 = vsyncpa [#allocation4], 1

</llo_original>
